<compile_context>
chip_gen: v5e
topology: v5e:2x2
jax: 0.10.0
libtpu: 0.0.40
codegen_flags: <defaults>
</compile_context>

<pallas_src>
import jax
import jax.numpy as jnp
from jax.experimental import pallas as pl
from jax.experimental.pallas import tpu as pltpu


def _coupling_kernel(x_ref, t_ref, o_ref):
    # x_ref: (Bt, N, H) native dtype; t_ref: (Bt, 1, H) native dtype
    # o_ref: (Bt, H) native dtype
    x = x_ref[...]                                    # (Bt, N, H)
    t = t_ref[...]                                    # (Bt, 1, H)

    # Dot-product scores of the target node against every node, on the MXU
    # with f32 accumulation (decode-attention 'bqd,bkd->bqk' with q-len 1).
    s = jnp.einsum("bmh,bnh->bmn", t, x,
                   preferred_element_type=jnp.float32)        # (Bt, 1, N) f32

    # Numerically stable softmax over the node axis (tiny lane reductions).
    m = jnp.max(s, axis=-1, keepdims=True)                    # (Bt, 1, 1)
    p = jnp.exp(s - m)                                        # (Bt, 1, N) f32
    denom = jnp.sum(p, axis=-1, keepdims=True)                # (Bt, 1, 1)

    # Weighted sum of node representations on the MXU; normalization deferred
    # to a single per-row divide on the (Bt, 1, H) context.
    ctx = jnp.einsum("bmn,bnh->bmh", p.astype(x.dtype), x,
                     preferred_element_type=jnp.float32)      # (Bt, 1, H) f32
    ctx = ctx * (1.0 / denom)                                 # (Bt, 1, H) f32

    # Sublane/lane-dense (Bt, H) output store.
    o_ref[...] = ctx[:, 0, :].astype(o_ref.dtype)


def _round_up(x, m):
    return (x + m - 1) // m * m


def _pick_b_tile(B, row_bytes, target_bytes=4 << 20, cap_bytes=6 << 20):
    """Pick a batch tile. Returns (b_tile, needs_padding)."""
    row_bytes = max(int(row_bytes), 1)
    target_rows = max(1, target_bytes // row_bytes)
    cap_rows = max(1, cap_bytes // row_bytes)

    # 1) multiples of 8 that divide B exactly -> no jnp.pad HBM copy.
    divs = [d for d in range(8, min(B, cap_rows) + 1, 8) if B % d == 0]
    if divs:
        two_step = [d for d in divs if d <= target_rows and B // d >= 2]
        if two_step:                       # near-target tile AND >=2 grid steps
            return max(two_step), False
        fit = [d for d in divs if d <= target_rows]
        if fit:
            return max(fit), False
        return min(divs), False

    # 2) small / oddly-sized batch: one full-extent block (legal, no padding).
    if B <= cap_rows and B <= max(8, target_rows):
        return B, False

    # 3) fallback: pad the batch to a multiple-of-8 tile (extra HBM copy).
    bt = max(8, min(_round_up(min(target_rows, cap_rows), 8), _round_up(B, 8)))
    return bt, True


def prediction_decoder(inputs, index_of_node, *, b_tile=None):
    """inputs: (B, N, H), index_of_node: int (static or traced) -> (B, H)."""
    B, N, H = inputs.shape
    dtype = inputs.dtype                      # DMA in native dtype (f32 / bf16)
    itemsize = jnp.dtype(dtype).itemsize

    if b_tile is None:
        b_tile, _ = _pick_b_tile(B, N * H * itemsize)
    else:
        b_tile = max(1, int(b_tile))

    B_pad = _round_up(B, b_tile)
    if B_pad != B:
        # Fallback only (see _pick_b_tile): zero rows are numerically benign
        # (uniform softmax, zero context) and are sliced off below.
        inputs_p = jnp.pad(inputs, ((0, B_pad - B), (0, 0), (0, 0)))
    else:
        inputs_p = inputs

    # Target-node gather in the wrapper (tiny O(B*H) traffic), kept as a
    # (B, 1, H) slab so its tile layout matches inputs'. Index is clamped so an
    # out-of-range value can never read stray VMEM.
    if isinstance(index_of_node, int):
        idx = min(max(int(index_of_node), 0), N - 1)          # static slice
        target_p = inputs_p[:, idx:idx + 1, :]
    else:
        idx = jnp.clip(jnp.asarray(index_of_node, jnp.int32), 0, N - 1)
        target_p = jax.lax.dynamic_slice_in_dim(inputs_p, idx, 1, axis=1)

    grid = (B_pad // b_tile,)

    grid_spec = pltpu.PrefetchScalarGridSpec(
        num_scalar_prefetch=0,
        grid=grid,
        in_specs=[
            pl.BlockSpec((b_tile, N, H), lambda b: (b, 0, 0)),
            pl.BlockSpec((b_tile, 1, H), lambda b: (b, 0, 0)),
        ],
        out_specs=pl.BlockSpec((b_tile, H), lambda b: (b, 0)),
    )

    cost = pl.CostEstimate(
        flops=4 * B_pad * N * H,                       # two MAC contractions
        transcendentals=B_pad * N,                     # exp
        bytes_accessed=(B_pad * N * H + 2 * B_pad * H) * itemsize,
    )

    out = pl.pallas_call(
        _coupling_kernel,
        out_shape=jax.ShapeDtypeStruct((B_pad, H), dtype),
        grid_spec=grid_spec,
        compiler_params=pltpu.CompilerParams(
            dimension_semantics=("parallel",),          # batch is independent
            vmem_limit_bytes=32 * 1024 * 1024,          # 2x <=6 MiB tiles + temps
        ),
        cost_estimate=cost,
    )(inputs_p, target_p)

    return out[:B]


def _reference(inputs, index_of_node):
    target = inputs[:, index_of_node, :]                           # (B, H)
    scores = jnp.sum(inputs * target[:, None, :], axis=-1)         # (B, N)
    weights = jax.nn.softmax(scores, axis=-1)                      # (B, N)
    return jnp.sum(weights[..., None] * inputs, axis=1)            # (B, H)


if __name__ == "__main__":
    key = jax.random.PRNGKey(0)
    B, N, H = 2, 8, 32
    inputs = jax.random.normal(key, (B, N, H), dtype=jnp.float32)
    index_of_node = 3

    ref = _reference(inputs, index_of_node)

    # static (Python int) index path, f32 inputs
    out = prediction_decoder(inputs, index_of_node)
    out = jax.block_until_ready(out)
    assert out.shape == (B, H)
    assert jnp.allclose(out, ref, atol=1e-5, rtol=1e-5)

    # dynamic (traced) index path under jit, f32 inputs
    out_dyn = jax.jit(prediction_decoder)(inputs, jnp.int32(index_of_node))
    out_dyn = jax.block_until_ready(out_dyn)
    assert jnp.allclose(out_dyn, ref, atol=1e-5, rtol=1e-5)

    # native-dtype (bf16) DMA path: no wrapper-side cast, f32 softmax inside
    inputs_bf16 = inputs.astype(jnp.bfloat16)
    ref_bf16 = _reference(inputs_bf16.astype(jnp.float32), index_of_node)
    out_bf16 = prediction_decoder(inputs_bf16, index_of_node)
    out_bf16 = jax.block_until_ready(out_bf16)
    assert out_bf16.dtype == jnp.bfloat16
    assert jnp.allclose(out_bf16.astype(jnp.float32), ref_bf16,
                        atol=2e-2, rtol=2e-2)

    print("KERNEL_OK")
</pallas_src>

<mosaic_0001>
module attributes {stable_mosaic.version = 11 : i64} {
  func.func @_coupling_kernel(%arg0: i32, %arg1: memref<2x8x32xf32, #tpu.memory_space<vmem>>, %arg2: memref<2x1x32xf32, #tpu.memory_space<vmem>>, %arg3: memref<2x32xf32, #tpu.memory_space<vmem>>) attributes {dimension_semantics = [#tpu.dimension_semantics<parallel>], iteration_bounds = array<i64: 1>, scalar_prefetch = 0 : i64, scratch_operands = 0 : i64, tpu.core_type = #tpu.core_type<tc>, window_params = [{transform_indices = @transform_0, window_bounds = array<i64: 2, 8, 32>}, {transform_indices = @transform_1, window_bounds = array<i64: 2, 1, 32>}, {transform_indices = @transform_2, window_bounds = array<i64: 2, 32>}]} {
    %c0 = arith.constant 0 : index
    %c0_0 = arith.constant 0 : index
    %c0_1 = arith.constant 0 : index
    %0 = vector.load %arg1[%c0, %c0_0, %c0_1] : memref<2x8x32xf32, #tpu.memory_space<vmem>>, vector<2x8x32xf32>
    %c0_2 = arith.constant 0 : index
    %c0_3 = arith.constant 0 : index
    %c0_4 = arith.constant 0 : index
    %1 = vector.load %arg2[%c0_2, %c0_3, %c0_4] : memref<2x1x32xf32, #tpu.memory_space<vmem>>, vector<2x1x32xf32>
    "tpu.trace_start"() <{level = 10 : i32, message = "bmh,bnh->bmn"}> : () -> ()
    %cst = arith.constant dense<0.000000e+00> : vector<2x1x8xf32>
    %2 = tpu.matmul %1, %0, %cst {dimension_numbers = #tpu.dot_dimension_numbers<[2], [2], [1], [1], [0, 0, 0, 1, 1, 1], [0], [0]>} : vector<2x1x32xf32>, vector<2x8x32xf32>, vector<2x1x8xf32> -> vector<2x1x8xf32>
    "tpu.trace_stop"() : () -> ()
    %cst_5 = arith.constant dense<0xFF800000> : vector<2x1xf32>
    %3 = vector.multi_reduction <maximumf>, %2, %cst_5 [2] : vector<2x1x8xf32> to vector<2x1xf32>
    %4 = vector.shape_cast %3 : vector<2x1xf32> to vector<2x1x1xf32>
    %5 = vector.broadcast %4 : vector<2x1x1xf32> to vector<2x1x8xf32>
    %6 = arith.subf %2, %5 : vector<2x1x8xf32>
    %7 = math.exp %6 : vector<2x1x8xf32>
    %cst_6 = arith.constant dense<0.000000e+00> : vector<2x1xf32>
    %8 = vector.multi_reduction <add>, %7, %cst_6 [2] : vector<2x1x8xf32> to vector<2x1xf32>
    %9 = vector.shape_cast %8 : vector<2x1xf32> to vector<2x1x1xf32>
    "tpu.trace_start"() <{level = 10 : i32, message = "bmn,bnh->bmh"}> : () -> ()
    %cst_7 = arith.constant dense<0.000000e+00> : vector<2x1x32xf32>
    %10 = tpu.matmul %7, %0, %cst_7 {dimension_numbers = #tpu.dot_dimension_numbers<[2], [1], [1], [2], [0, 0, 0, 1, 1, 2], [0], [0]>} : vector<2x1x8xf32>, vector<2x8x32xf32>, vector<2x1x32xf32> -> vector<2x1x32xf32>
    "tpu.trace_stop"() : () -> ()
    %cst_8 = arith.constant 1.000000e+00 : f32
    %11 = vector.broadcast %cst_8 : f32 to vector<2x1x1xf32>
    %12 = arith.divf %11, %9 : vector<2x1x1xf32>
    %13 = vector.broadcast %12 : vector<2x1x1xf32> to vector<2x1x32xf32>
    %14 = arith.mulf %10, %13 : vector<2x1x32xf32>
    %15 = vector.shape_cast %14 : vector<2x1x32xf32> to vector<2x32xf32>
    %c0_9 = arith.constant 0 : index
    %c0_10 = arith.constant 0 : index
    %16 = vector.load %arg3[%c0_9, %c0_10] : memref<2x32xf32, #tpu.memory_space<vmem>>, vector<2x32xf32>
    tpu.vector_store %arg3[%c0_9, %c0_10], %15 {strides = array<i32>} : memref<2x32xf32, #tpu.memory_space<vmem>>, vector<2x32xf32>,
    return
  }
  func.func @transform_0(%arg0: i32) -> (i32, i32, i32) {
    %c0_i32 = arith.constant 0 : i32
    %c0_i32_0 = arith.constant 0 : i32
    %c0_i32_1 = arith.constant 0 : i32
    return %arg0, %c0_i32, %c0_i32_0 : i32, i32, i32
  }
  func.func @transform_1(%arg0: i32) -> (i32, i32, i32) {
    %c0_i32 = arith.constant 0 : i32
    %c0_i32_0 = arith.constant 0 : i32
    %c0_i32_1 = arith.constant 0 : i32
    return %arg0, %c0_i32, %c0_i32_0 : i32, i32, i32
  }
  func.func @transform_2(%arg0: i32) -> (i32, i32) {
    %c0_i32 = arith.constant 0 : i32
    %c0_i32_0 = arith.constant 0 : i32
    return %arg0, %c0_i32 : i32, i32
  }
}

</mosaic_0001>

<llo_original>
// kernel: tpu_custom_call.1
$region0: #{tpu_custom_call.1}
  #allocation0 [shape = 'u32[]', space=smem, size = 0x4, offset = 0x4, fixed_abs, tag = 'smem constant byte address 0x4 - core index']
  #allocation1 [shape = 'u32[72,128]{1,0:T(1,128)}', space=vmem, size = 0x9000, scoped, tag = 'internal scratch']
  %s0 = inlined_call_operand.hbm [shape: f32[2,8,32], index: 0, kind: input, shape index: {}]
  %s1 = inlined_call_operand.hbm [shape: f32[2,1,32], index: 1, kind: input, shape index: {}]
  %s2 = inlined_call_operand.hbm [shape: f32[2,32], index: 2, kind: output, shape index: {}]
  %s3 = sld [smem:[#allocation0]]
  $region26: #{tpu_custom_call.1} parent=0
    _
  %s5 = ssub.s32 1, %s3
  %s6 = scalar_select 0, %s5, %s3
  $region1: #{tpu_custom_call.1} parent=0
    #allocation2 [shape = 'u8[8192]{0}', space=vmem, size = 0x2000, scoped, tag = 'input window, operand 0, single buffered']
    #allocation3 [shape = 's32[1]{0}', space=sflag, size = 0x4, scoped, tag = 'scoped memory for tpu_custom_call.1']
    #allocation4 [shape = 's32[1]{0}', space=sflag, size = 0x4, scoped, tag = 'scoped memory for tpu_custom_call.1']
    #allocation5 [shape = 'u8[1024]{0}', space=vmem, size = 0x400, scoped, tag = 'input window, operand 1, single buffered']
    #allocation6 [shape = 's32[1]{0}', space=sflag, size = 0x4, scoped, tag = 'scoped memory for tpu_custom_call.1']
    #allocation7 [shape = 'u8[1024]{0}', space=vmem, size = 0x400, scoped, tag = 'output window, operand 0, single buffered']
    %7 = vsyncpa [#allocation3], 0
    %8 = vsyncpa [#allocation6], 0
    %9 = vsyncpa [#allocation4], 0
    // Predicated region
    $region2: #{tpu_custom_call.1} parent=1 // pred_check
      _
    $region3: #{tpu_custom_call.1} parent=1 // pred_check_branch
      %11 = sbr.rel (0) target = $region5
    $region4: #{tpu_custom_call.1} parent=1 // pred_region
      %13 = vsyncadd [#allocation3], 0
      %s14 = sshll.u32 %s0, 4
      %s15 = int_to_ptr.hbm [resolvable:$true] %s14
      %s16 = sshll.u32 [#allocation2], 4
      %s17 = int_to_ptr.vmem [resolvable:$true] %s16
      %22 = dma.hbm_to_vmem [thread:$0]  %s15, 256, %s17, [#allocation3], 128, 128, 8
    $region5: #{tpu_custom_call.1} parent=1 // pred_fallthru
      _
    // Predicated region
    $region6: #{tpu_custom_call.1} parent=1 // pred_check
      _
    $region7: #{tpu_custom_call.1} parent=1 // pred_check_branch
      %24 = sbr.rel (0) target = $region9
    $region8: #{tpu_custom_call.1} parent=1 // pred_region
      %26 = vsyncadd [#allocation6], 0
      %s27 = sshll.u32 %s1, 4
      %s28 = int_to_ptr.hbm [resolvable:$true] %s27
      %s29 = sshll.u32 [#allocation5], 4
      %s30 = int_to_ptr.vmem [resolvable:$true] %s29
      %35 = dma.hbm_to_vmem [thread:$0]  %s28, 32, %s30, [#allocation6], 16, 16, 1
    $region9: #{tpu_custom_call.1} parent=1 // pred_fallthru
      _
    // Predicated region
    $region10: #{tpu_custom_call.1} parent=1 // pred_check
      _
    $region11: #{tpu_custom_call.1} parent=1 // pred_check_branch
      %37 = sbr.rel (0) target = $region13
    $region12: #{tpu_custom_call.1} parent=1 // pred_region
      %39 = dma.done [#allocation3], 256
    $region13: #{tpu_custom_call.1} parent=1 // pred_fallthru
      _
    // Predicated region
    $region14: #{tpu_custom_call.1} parent=1 // pred_check
      _
    $region15: #{tpu_custom_call.1} parent=1 // pred_check_branch
      %41 = sbr.rel (0) target = $region17
    $region16: #{tpu_custom_call.1} parent=1 // pred_region
      %43 = dma.done [#allocation6], 32
    $region17: #{tpu_custom_call.1} parent=1 // pred_fallthru
      _
    %v44 = vld [vmem:[#allocation2] sm:$0xff]
    %v45 = vld [vmem:[#allocation2 + $0x8] sm:$0xff]
    %v46 = vld [vmem:[#allocation5] sm:$0x1]
    %v47 = vld [vmem:[#allocation5 + $0x1] sm:$0x1]
    %vm48 = vcmask 261120
    %v50 = vsel %vm48, %v46, 0
    %v53 = vsel %vm48, %v44, 0
    %55 = vmatpush.xpose.msra.mxu0 0.0
    %56 = vmatpush.xpose.msra.mxu0 0.0
    %57 = vmatpush.xpose.msra.mxu0 0.0
    %58 = vmatpush.xpose.msra.mxu0 0.0
    %59 = vmatpush.xpose.msra.mxu0 0.0
    %60 = vmatpush.xpose.msra.mxu0 0.0
    %61 = vmatpush.xpose.msra.mxu0 0.0
    %62 = vmatpush.xpose.msra.mxu0 0.0
    %63 = vmatpush.xpose.msra.mxu0 0.0
    %64 = vmatpush.xpose.msra.mxu0 0.0
    %65 = vmatpush.xpose.msra.mxu0 0.0
    %66 = vmatpush.xpose.msra.mxu0 0.0
    %67 = vmatpush.xpose.msra.mxu0 0.0
    %68 = vmatpush.xpose.msra.mxu0 0.0
    %69 = vmatpush.xpose.msra.mxu0 0.0
    %70 = vmatpush.xpose.msra.mxu0 %v53
    %71 = vmatmul.f32.gmra.mxu0 %v50
    %v72 = vpop.f32.mrf.mxu0
    %v73 = vadd.f32 0.0, %v72
    %74 = vdwg.mxu0
    %v76 = vsel %vm48, %v47, 0
    %v79 = vsel %vm48, %v45, 0
    %81 = vmatpush.xpose.msra.mxu0 0.0
    %82 = vmatpush.xpose.msra.mxu0 0.0
    %83 = vmatpush.xpose.msra.mxu0 0.0
    %84 = vmatpush.xpose.msra.mxu0 0.0
    %85 = vmatpush.xpose.msra.mxu0 0.0
    %86 = vmatpush.xpose.msra.mxu0 0.0
    %87 = vmatpush.xpose.msra.mxu0 0.0
    %88 = vmatpush.xpose.msra.mxu0 0.0
    %89 = vmatpush.xpose.msra.mxu0 0.0
    %90 = vmatpush.xpose.msra.mxu0 0.0
    %91 = vmatpush.xpose.msra.mxu0 0.0
    %92 = vmatpush.xpose.msra.mxu0 0.0
    %93 = vmatpush.xpose.msra.mxu0 0.0
    %94 = vmatpush.xpose.msra.mxu0 0.0
    %95 = vmatpush.xpose.msra.mxu0 0.0
    %96 = vmatpush.xpose.msra.mxu0 %v79
    %97 = vmatmul.f32.gmra.mxu0 %v76
    %v98 = vpop.f32.mrf.mxu0
    %v99 = vadd.f32 0.0, %v98
    %100 = vdwg.mxu0
    %vm101 = vcmask 57344
    %v102 = vsel %vm101, %v73, -inf
    %103 = vmax.xlane.f32.xlu0 %v102
    %v104 = vpop.xlane.xlu0 %103
    %v105 = vsel %vm101, %v99, -inf
    %106 = vmax.xlane.f32.xlu0 %v105
    %v107 = vpop.xlane.xlu0 %106
    %v108 = vsub.f32 %v73, %v104
    %v109 = vsub.f32 %v99, %v107
    %v110 = vmul.f32 %v108, 1.442695
    %v111 = vpow.pop %v110
    %v112 = vmul.f32 %v109, 1.442695
    %v113 = vpow.pop %v112
    %v114 = vsel %vm101, %v111, 0.0
    %115 = vadd.xlane.f32.xlu0 %v114
    %v116 = vpop.xlane.xlu0 %115
    %v117 = vsel %vm101, %v113, 0.0
    %118 = vadd.xlane.f32.xlu0 %v117
    %v119 = vpop.xlane.xlu0 %118
    %vm120 = vcmask 64512
    %v122 = vsel %vm120, %v111, 0
    %124 = vmatpush.msra.mxu0 0.0
    %125 = vmatpush.msra.mxu0 0.0
    %126 = vmatpush.msra.mxu0 0.0
    %127 = vmatpush.msra.mxu0 0.0
    %128 = vmatpush.msra.mxu0 0.0
    %129 = vmatpush.msra.mxu0 0.0
    %130 = vmatpush.msra.mxu0 0.0
    %131 = vmatpush.msra.mxu0 0.0
    %132 = vmatpush.msra.mxu0 0.0
    %133 = vmatpush.msra.mxu0 0.0
    %134 = vmatpush.msra.mxu0 0.0
    %135 = vmatpush.msra.mxu0 0.0
    %136 = vmatpush.msra.mxu0 0.0
    %137 = vmatpush.msra.mxu0 0.0
    %138 = vmatpush.msra.mxu0 0.0
    %139 = vmatpush.msra.mxu0 %v44
    %140 = vmatmul.f32.gmra.mxu0 %v122
    %v141 = vpop.f32.mrf.mxu0
    %v142 = vadd.f32 0.0, %v141
    %143 = vdwg.mxu0
    %v145 = vsel %vm120, %v113, 0
    %147 = vmatpush.msra.mxu0 0.0
    %148 = vmatpush.msra.mxu0 0.0
    %149 = vmatpush.msra.mxu0 0.0
    %150 = vmatpush.msra.mxu0 0.0
    %151 = vmatpush.msra.mxu0 0.0
    %152 = vmatpush.msra.mxu0 0.0
    %153 = vmatpush.msra.mxu0 0.0
    %154 = vmatpush.msra.mxu0 0.0
    %155 = vmatpush.msra.mxu0 0.0
    %156 = vmatpush.msra.mxu0 0.0
    %157 = vmatpush.msra.mxu0 0.0
    %158 = vmatpush.msra.mxu0 0.0
    %159 = vmatpush.msra.mxu0 0.0
    %160 = vmatpush.msra.mxu0 0.0
    %161 = vmatpush.msra.mxu0 0.0
    %162 = vmatpush.msra.mxu0 %v45
    %163 = vmatmul.f32.gmra.mxu0 %v145
    %v164 = vpop.f32.mrf.mxu0
    %v165 = vadd.f32 0.0, %v164
    %166 = vdwg.mxu0
    %v167 = vrcp.pop %v116
    %v168 = vmul.f32 %v116, %v167
    %v169 = vsub.f32 1.0, %v168
    %v170 = vmul.f32 %v167, %v169
    %v171 = vadd.f32 %v167, %v170
    %vm172 = vweird.f32 %v116
    %vm173 = vweird.f32 %v167
    %vm174 = vmor %vm172, %vm173
    %v175 = vsel %vm174, %v167, %v171
    %v176 = vand.u32 2147483647, %v116
    %vm177 = vcmp.eq.f32.partialorder %v176, 8.507059e+37
    %v178 = vand.u32 %v116, 2147483648
    %v179 = vor.u32 1.1754944e-38, %v178
    %v180 = vsel %vm177, %v179, %v175
    %v181 = vmul.f32 1.0, %v180
    %v182 = vrcp.pop %v119
    %v183 = vmul.f32 %v119, %v182
    %v184 = vsub.f32 1.0, %v183
    %v185 = vmul.f32 %v182, %v184
    %v186 = vadd.f32 %v182, %v185
    %vm187 = vweird.f32 %v119
    %vm188 = vweird.f32 %v182
    %vm189 = vmor %vm187, %vm188
    %v190 = vsel %vm189, %v182, %v186
    %v191 = vand.u32 2147483647, %v119
    %vm192 = vcmp.eq.f32.partialorder %v191, 8.507059e+37
    %v193 = vand.u32 %v119, 2147483648
    %v194 = vor.u32 1.1754944e-38, %v193
    %v195 = vsel %vm192, %v194, %v190
    %v196 = vmul.f32 1.0, %v195
    %v197 = vmul.f32 %v142, %v181
    %v198 = vmul.f32 %v165, %v196
    %v201 = vrot.slane %v198, 7
    %vm202 = vcmask 1041409
    %v203 = vsel %vm202, %v201, %v197
    %vm205 = vcmask 254976
    %206 = vst.msk [vmem:[#allocation7] sm:$0x3] %vm205, %v203
    // Predicated region
    $region18: #{tpu_custom_call.1} parent=1 // pred_check
      _
    $region19: #{tpu_custom_call.1} parent=1 // pred_check_branch
      %208 = sbr.rel (0) target = $region21
    $region20: #{tpu_custom_call.1} parent=1 // pred_region
      %210 = vsyncadd [#allocation4], 0
      %s212 = sshll.u32 [#allocation7], 4
      %s213 = int_to_ptr.vmem [resolvable:$true] %s212
      %s214 = sshll.u32 %s2, 4
      %s215 = int_to_ptr.hbm [resolvable:$true] %s214
      %217 = dma.vmem_to_hbm [thread:$0]  %s213, 32, %s215, [#allocation4]
    $region21: #{tpu_custom_call.1} parent=1 // pred_fallthru
      _
    // Predicated region
    $region22: #{tpu_custom_call.1} parent=1 // pred_check
      _
    $region23: #{tpu_custom_call.1} parent=1 // pred_check_branch
      %219 = sbr.rel (0) target = $region25
    $region24: #{tpu_custom_call.1} parent=1 // pred_region
      %221 = dma.done [#allocation4], 32
    $region25: #{tpu_custom_call.1} parent=1 // pred_fallthru
      _
    %222 = vsyncpa [#allocation3], 1
    %223 = vsyncpa [#allocation6], 1
    %224 = vsyncpa [#allocation4], 1

</llo_original>
